<compile_context>
chip_gen: v5e
topology: v5e:2x2
jax: 0.10.0
libtpu: 0.0.40
codegen_flags: <defaults>
</compile_context>

<pallas_src>
import math
import jax
import jax.numpy as jnp
from jax.experimental import pallas as pl
from jax.experimental.pallas import tpu as pltpu

_K_IN = 2 * 14 * 14    # 392 input features (= full last dim of x view)
_H = 256               # hidden width
_N_PAD = 128           # lane-dense padded output width (true output width is 1)
_MAX_TB = 1024         # batch tile cap


def _mlp_kernel(x_ref, w1_ref, b1_ref, w2_ref, b2_ref, w3_ref, b3_ref, o_ref):
    # lin1 + ReLU: bf16 MXU operands (cast on-chip), f32 accumulation/VPU math.
    x = x_ref[...].astype(jnp.bfloat16)
    h1 = jnp.dot(x, w1_ref[...], preferred_element_type=jnp.float32)
    h1 = jnp.maximum(h1 + b1_ref[...], 0.0)
    # lin2 + ReLU
    h2 = jnp.dot(h1.astype(jnp.bfloat16), w2_ref[...],
                 preferred_element_type=jnp.float32)
    h2 = jnp.maximum(h2 + b2_ref[...], 0.0)
    # lin3 (output lane-padded to 128 -> unmasked full-width store)
    o = jnp.dot(h2.astype(jnp.bfloat16), w3_ref[...],
                preferred_element_type=jnp.float32)
    o_ref[...] = (o + b3_ref[...]).astype(o_ref.dtype)


def mlp_base_forward(x_nchw, params):
    """x_nchw: (B, 2, 14, 14) float32. Returns (B, 1) float32."""
    w1, b1, w2, b2, w3, b3 = params
    B = x_nchw.shape[0]

    # Same semantics as torch input.view(B, 2*14*14); free (bit-preserving).
    x = x_nchw.reshape(B, _K_IN)

    # Batch tile: either the whole (possibly tiny) batch, or a 1024-row tile
    # with a partial trailing block handled by Pallas.
    TB = B if B <= _MAX_TB else _MAX_TB
    grid = (pl.cdiv(B, TB),)

    # Small one-time weight prep: bf16 MXU operands, output lane-padded.
    w1_b = w1.astype(jnp.bfloat16)                                    # (392, 256)
    w2_b = w2.astype(jnp.bfloat16)                                    # (256, 256)
    w3_b = jnp.pad(w3, ((0, 0), (0, _N_PAD - w3.shape[1]))).astype(jnp.bfloat16)
    b1_f = b1.astype(jnp.float32)                                     # (1, 256)
    b2_f = b2.astype(jnp.float32)                                     # (1, 256)
    b3_f = jnp.pad(b3, ((0, 0), (0, _N_PAD - b3.shape[1]))).astype(jnp.float32)

    resident = lambda shape: pl.BlockSpec(shape, lambda i: (0, 0))

    w_elems = _K_IN * _H + _H * _H + _H * _N_PAD
    cost = pl.CostEstimate(
        flops=2 * B * w_elems,
        transcendentals=0,
        bytes_accessed=(B * _K_IN * 4            # f32 x stream
                        + B * _N_PAD * 4         # f32 out stream
                        + w_elems * 2            # bf16 weights (resident)
                        + (2 * _H + _N_PAD) * 4))  # f32 biases

    out = pl.pallas_call(
        _mlp_kernel,
        out_shape=jax.ShapeDtypeStruct((B, _N_PAD), jnp.float32),
        grid=grid,
        in_specs=[
            pl.BlockSpec((TB, _K_IN), lambda i: (i, 0)),     # x: streamed
            resident((_K_IN, _H)), resident((1, _H)),        # lin1 w/b: resident
            resident((_H, _H)), resident((1, _H)),           # lin2 w/b: resident
            resident((_H, _N_PAD)), resident((1, _N_PAD)),   # lin3 w/b: resident
        ],
        out_specs=pl.BlockSpec((TB, _N_PAD), lambda i: (i, 0)),
        compiler_params=pltpu.CompilerParams(
            dimension_semantics=("parallel",),
            vmem_limit_bytes=32 * 1024 * 1024,
        ),
        cost_estimate=cost,
    )(x, w1_b, b1_f, w2_b, b2_f, w3_b, b3_f)

    return out[:, :1]


def _xavier_uniform(key, fan_in, fan_out):
    # Matches nn.init.xavier_uniform_ (gain=1). PyTorch weight is (out, in);
    # return the transposed (in, out) layout so the kernel does x @ W.
    bound = math.sqrt(6.0 / (fan_in + fan_out))
    w_torch = jax.random.uniform(key, (fan_out, fan_in), jnp.float32,
                                 minval=-bound, maxval=bound)
    return jnp.transpose(w_torch)  # (in, out)


def init_mlp_base_params(key):
    k1, k2, k3 = jax.random.split(key, 3)
    w1 = _xavier_uniform(k1, _K_IN, _H)   # (392, 256)
    b1 = jnp.zeros((1, _H), jnp.float32)
    w2 = _xavier_uniform(k2, _H, _H)      # (256, 256)
    b2 = jnp.zeros((1, _H), jnp.float32)
    w3 = _xavier_uniform(k3, _H, 1)       # (256, 1)
    b3 = jnp.zeros((1, 1), jnp.float32)
    return (w1, b1, w2, b2, w3, b3)


if __name__ == "__main__":
    key = jax.random.PRNGKey(0)
    pkey, xkey = jax.random.split(key)
    params = init_mlp_base_params(pkey)

    # Small deterministic input consistent with the forward's view(B, 2*14*14).
    x = jax.random.normal(xkey, (2, 2, 14, 14), jnp.float32)

    out = mlp_base_forward(x, params)
    out = jax.block_until_ready(out)
    assert out.shape == (2, 1) and out.dtype == jnp.float32

    # Pure-JAX f32 reference of the same math (bf16 MXU operands in the kernel
    # loosen the tolerance slightly; accumulation/bias/ReLU stay f32).
    w1, b1, w2, b2, w3, b3 = params
    xf = x.reshape(2, -1)
    ref = jnp.maximum(xf @ w1 + b1, 0.0)
    ref = jnp.maximum(ref @ w2 + b2, 0.0)
    ref = ref @ w3 + b3
    assert jnp.allclose(out, ref, atol=3e-2, rtol=3e-2), (out, ref)

    print("KERNEL_OK")
</pallas_src>

<mosaic_0001>
module attributes {stable_mosaic.version = 11 : i64} {
  func.func @_mlp_kernel(%arg0: i32, %arg1: memref<2x392xf32, #tpu.memory_space<vmem>>, %arg2: memref<392x256xbf16, #tpu.memory_space<vmem>>, %arg3: memref<1x256xf32, #tpu.memory_space<vmem>>, %arg4: memref<256x256xbf16, #tpu.memory_space<vmem>>, %arg5: memref<1x256xf32, #tpu.memory_space<vmem>>, %arg6: memref<256x128xbf16, #tpu.memory_space<vmem>>, %arg7: memref<1x128xf32, #tpu.memory_space<vmem>>, %arg8: memref<2x128xf32, #tpu.memory_space<vmem>>) attributes {dimension_semantics = [#tpu.dimension_semantics<parallel>], iteration_bounds = array<i64: 1>, scalar_prefetch = 0 : i64, scratch_operands = 0 : i64, tpu.core_type = #tpu.core_type<tc>, window_params = [{transform_indices = @transform_0, window_bounds = array<i64: 2, 392>}, {pipeline_mode = #tpu.pipeline_mode<synchronous>, transform_indices = @transform_1, window_bounds = array<i64: 392, 256>}, {pipeline_mode = #tpu.pipeline_mode<synchronous>, transform_indices = @transform_2, window_bounds = array<i64: 1, 256>}, {pipeline_mode = #tpu.pipeline_mode<synchronous>, transform_indices = @transform_3, window_bounds = array<i64: 256, 256>}, {pipeline_mode = #tpu.pipeline_mode<synchronous>, transform_indices = @transform_4, window_bounds = array<i64: 1, 256>}, {pipeline_mode = #tpu.pipeline_mode<synchronous>, transform_indices = @transform_5, window_bounds = array<i64: 256, 128>}, {pipeline_mode = #tpu.pipeline_mode<synchronous>, transform_indices = @transform_6, window_bounds = array<i64: 1, 128>}, {transform_indices = @transform_7, window_bounds = array<i64: 2, 128>}]} {
    %c0 = arith.constant 0 : index
    %c0_0 = arith.constant 0 : index
    %0 = vector.load %arg1[%c0, %c0_0] : memref<2x392xf32, #tpu.memory_space<vmem>>, vector<2x392xf32>
    %1 = arith.truncf %0 : vector<2x392xf32> to vector<2x392xbf16>
    %c0_1 = arith.constant 0 : index
    %c0_2 = arith.constant 0 : index
    %2 = vector.load %arg2[%c0_1, %c0_2] : memref<392x256xbf16, #tpu.memory_space<vmem>>, vector<392x256xbf16>
    %cst = arith.constant dense<0.000000e+00> : vector<2x256xf32>
    %3 = tpu.matmul %1, %2, %cst {dimension_numbers = #tpu.dot_dimension_numbers<[1], [0], [0], [1], [0, 0, 1, 1], [], []>} : vector<2x392xbf16>, vector<392x256xbf16>, vector<2x256xf32> -> vector<2x256xf32>
    %c0_3 = arith.constant 0 : index
    %c0_4 = arith.constant 0 : index
    %4 = vector.load %arg3[%c0_3, %c0_4] : memref<1x256xf32, #tpu.memory_space<vmem>>, vector<1x256xf32>
    %5 = vector.broadcast %4 : vector<1x256xf32> to vector<2x256xf32>
    %6 = arith.addf %3, %5 : vector<2x256xf32>
    %cst_5 = arith.constant 0.000000e+00 : f32
    %7 = vector.broadcast %cst_5 : f32 to vector<2x256xf32>
    %8 = arith.maximumf %6, %7 : vector<2x256xf32>
    %9 = arith.truncf %8 : vector<2x256xf32> to vector<2x256xbf16>
    %c0_6 = arith.constant 0 : index
    %c0_7 = arith.constant 0 : index
    %10 = vector.load %arg4[%c0_6, %c0_7] : memref<256x256xbf16, #tpu.memory_space<vmem>>, vector<256x256xbf16>
    %cst_8 = arith.constant dense<0.000000e+00> : vector<2x256xf32>
    %11 = tpu.matmul %9, %10, %cst_8 {dimension_numbers = #tpu.dot_dimension_numbers<[1], [0], [0], [1], [0, 0, 1, 1], [], []>} : vector<2x256xbf16>, vector<256x256xbf16>, vector<2x256xf32> -> vector<2x256xf32>
    %c0_9 = arith.constant 0 : index
    %c0_10 = arith.constant 0 : index
    %12 = vector.load %arg5[%c0_9, %c0_10] : memref<1x256xf32, #tpu.memory_space<vmem>>, vector<1x256xf32>
    %13 = vector.broadcast %12 : vector<1x256xf32> to vector<2x256xf32>
    %14 = arith.addf %11, %13 : vector<2x256xf32>
    %cst_11 = arith.constant 0.000000e+00 : f32
    %15 = vector.broadcast %cst_11 : f32 to vector<2x256xf32>
    %16 = arith.maximumf %14, %15 : vector<2x256xf32>
    %17 = arith.truncf %16 : vector<2x256xf32> to vector<2x256xbf16>
    %c0_12 = arith.constant 0 : index
    %c0_13 = arith.constant 0 : index
    %18 = vector.load %arg6[%c0_12, %c0_13] : memref<256x128xbf16, #tpu.memory_space<vmem>>, vector<256x128xbf16>
    %cst_14 = arith.constant dense<0.000000e+00> : vector<2x128xf32>
    %19 = tpu.matmul %17, %18, %cst_14 {dimension_numbers = #tpu.dot_dimension_numbers<[1], [0], [0], [1], [0, 0, 1, 1], [], []>} : vector<2x256xbf16>, vector<256x128xbf16>, vector<2x128xf32> -> vector<2x128xf32>
    %c0_15 = arith.constant 0 : index
    %c0_16 = arith.constant 0 : index
    %20 = vector.load %arg7[%c0_15, %c0_16] : memref<1x128xf32, #tpu.memory_space<vmem>>, vector<1x128xf32>
    %21 = vector.broadcast %20 : vector<1x128xf32> to vector<2x128xf32>
    %22 = arith.addf %19, %21 : vector<2x128xf32>
    %c0_17 = arith.constant 0 : index
    %c0_18 = arith.constant 0 : index
    %23 = vector.load %arg8[%c0_17, %c0_18] : memref<2x128xf32, #tpu.memory_space<vmem>>, vector<2x128xf32>
    tpu.vector_store %arg8[%c0_17, %c0_18], %22 {strides = array<i32>} : memref<2x128xf32, #tpu.memory_space<vmem>>, vector<2x128xf32>,
    return
  }
  func.func @transform_0(%arg0: i32) -> (i32, i32) {
    %c0_i32 = arith.constant 0 : i32
    %c0_i32_0 = arith.constant 0 : i32
    return %arg0, %c0_i32 : i32, i32
  }
  func.func @transform_1(%arg0: i32) -> (i32, i32) {
    %c0_i32 = arith.constant 0 : i32
    %c0_i32_0 = arith.constant 0 : i32
    %c0_i32_1 = arith.constant 0 : i32
    return %c0_i32, %c0_i32_0 : i32, i32
  }
  func.func @transform_2(%arg0: i32) -> (i32, i32) {
    %c0_i32 = arith.constant 0 : i32
    %c0_i32_0 = arith.constant 0 : i32
    %c0_i32_1 = arith.constant 0 : i32
    return %c0_i32, %c0_i32_0 : i32, i32
  }
  func.func @transform_3(%arg0: i32) -> (i32, i32) {
    %c0_i32 = arith.constant 0 : i32
    %c0_i32_0 = arith.constant 0 : i32
    %c0_i32_1 = arith.constant 0 : i32
    return %c0_i32, %c0_i32_0 : i32, i32
  }
  func.func @transform_4(%arg0: i32) -> (i32, i32) {
    %c0_i32 = arith.constant 0 : i32
    %c0_i32_0 = arith.constant 0 : i32
    %c0_i32_1 = arith.constant 0 : i32
    return %c0_i32, %c0_i32_0 : i32, i32
  }
  func.func @transform_5(%arg0: i32) -> (i32, i32) {
    %c0_i32 = arith.constant 0 : i32
    %c0_i32_0 = arith.constant 0 : i32
    %c0_i32_1 = arith.constant 0 : i32
    return %c0_i32, %c0_i32_0 : i32, i32
  }
  func.func @transform_6(%arg0: i32) -> (i32, i32) {
    %c0_i32 = arith.constant 0 : i32
    %c0_i32_0 = arith.constant 0 : i32
    %c0_i32_1 = arith.constant 0 : i32
    return %c0_i32, %c0_i32_0 : i32, i32
  }
  func.func @transform_7(%arg0: i32) -> (i32, i32) {
    %c0_i32 = arith.constant 0 : i32
    %c0_i32_0 = arith.constant 0 : i32
    return %arg0, %c0_i32 : i32, i32
  }
}

</mosaic_0001>

<llo_original>
// kernel: tpu_custom_call.1
$region0: #{tpu_custom_call.1}
  #allocation0 [shape = 'u32[]', space=smem, size = 0x4, offset = 0x4, fixed_abs, tag = 'smem constant byte address 0x4 - core index']
  #allocation1 [shape = 'u32[72,128]{1,0:T(1,128)}', space=vmem, size = 0x9000, scoped, tag = 'internal scratch']
  %s0 = inlined_call_operand.hbm [shape: f32[2,392], index: 0, kind: input, shape index: {}]
  %s1 = inlined_call_operand.hbm [shape: bf16[392,256], index: 1, kind: input, shape index: {}]
  %s2 = inlined_call_operand.hbm [shape: f32[1,256], index: 2, kind: input, shape index: {}]
  %s3 = inlined_call_operand.hbm [shape: bf16[256,256], index: 3, kind: input, shape index: {}]
  %s4 = inlined_call_operand.vmem [shape: f32[1,256], index: 4, kind: input, shape index: {}]
  %s5 = inlined_call_operand.hbm [shape: bf16[256,128], index: 5, kind: input, shape index: {}]
  %s6 = inlined_call_operand.vmem [shape: f32[1,128], index: 6, kind: input, shape index: {}]
  %s7 = inlined_call_operand.hbm [shape: f32[2,128], index: 7, kind: output, shape index: {}]
  %s8 = sld [smem:[#allocation0]]
  $region58: #{tpu_custom_call.1} parent=0
    _
  %s10 = ssub.s32 1, %s8
  %s11 = scalar_select 0, %s10, %s8
  $region1: #{tpu_custom_call.1} parent=0
    #allocation2 [shape = 'u8[4096]{0}', space=vmem, size = 0x1000, scoped, tag = 'input window, operand 0, single buffered']
    #allocation3 [shape = 's32[1]{0}', space=sflag, size = 0x4, scoped, tag = 'scoped memory for tpu_custom_call.1']
    #allocation4 [shape = 's32[1]{0}', space=sflag, size = 0x4, scoped, tag = 'scoped memory for tpu_custom_call.1']
    #allocation5 [shape = 'u8[200704]{0}', space=vmem, size = 0x31000, scoped, tag = 'input window, operand 1, single buffered']
    #allocation6 [shape = 's32[1]{0}', space=sflag, size = 0x4, scoped, tag = 'scoped memory for tpu_custom_call.1']
    #allocation7 [shape = 'u8[1024]{0}', space=vmem, size = 0x400, scoped, tag = 'input window, operand 2, single buffered']
    #allocation8 [shape = 'u8[131072]{0}', space=vmem, size = 0x20000, scoped, tag = 'input window, operand 3, single buffered']
    #allocation9 [shape = 's32[1]{0}', space=sflag, size = 0x4, scoped, tag = 'scoped memory for tpu_custom_call.1']
    #allocation10 [shape = 'u8[65536]{0}', space=vmem, size = 0x10000, scoped, tag = 'input window, operand 5, single buffered']
    #allocation11 [shape = 'u8[1024]{0}', space=vmem, size = 0x400, scoped, tag = 'output window, operand 0, single buffered']
    %12 = vsyncpa [#allocation3], 0
    %13 = vsyncpa [#allocation6], 0
    %14 = vsyncpa [#allocation9], 0
    %15 = vsyncpa [#allocation4], 0
    // Predicated region
    $region2: #{tpu_custom_call.1} parent=1 // pred_check
      _
    $region3: #{tpu_custom_call.1} parent=1 // pred_check_branch
      %17 = sbr.rel (0) target = $region5
    $region4: #{tpu_custom_call.1} parent=1 // pred_region
      %19 = vsyncadd [#allocation3], 0
      %s21 = sshll.u32 %s0, 4
      %s22 = int_to_ptr.hbm [resolvable:$true] %s21
      %s23 = sshll.u32 [#allocation2], 4
      %s24 = int_to_ptr.vmem [resolvable:$true] %s23
      %26 = dma.hbm_to_vmem [thread:$0]  %s22, 128, %s24, [#allocation3]
    $region5: #{tpu_custom_call.1} parent=1 // pred_fallthru
      _
    // Predicated region
    $region6: #{tpu_custom_call.1} parent=1 // pred_check
      _
    $region7: #{tpu_custom_call.1} parent=1 // pred_check_branch
      %28 = sbr.rel (0) target = $region9
    $region8: #{tpu_custom_call.1} parent=1 // pred_region
      %30 = vsyncadd [#allocation6], 0
      %s31 = sshll.u32 %s1, 4
      %s32 = int_to_ptr.hbm [resolvable:$true] %s31
      %s33 = sshll.u32 [#allocation5], 4
      %s34 = int_to_ptr.vmem [resolvable:$true] %s33
      %39 = dma.hbm_to_vmem [thread:$0]  %s32, 6272, %s34, [#allocation6], 128, 128, 8
    $region9: #{tpu_custom_call.1} parent=1 // pred_fallthru
      _
    // Predicated region
    $region10: #{tpu_custom_call.1} parent=1 // pred_check
      _
    $region11: #{tpu_custom_call.1} parent=1 // pred_check_branch
      %41 = sbr.rel (0) target = $region13
    $region12: #{tpu_custom_call.1} parent=1 // pred_region
      %43 = vsyncadd [#allocation6], 0
      %s45 = sshll.u32 %s2, 4
      %s46 = int_to_ptr.hbm [resolvable:$true] %s45
      %s47 = sshll.u32 [#allocation7], 4
      %s48 = int_to_ptr.vmem [resolvable:$true] %s47
      %50 = dma.hbm_to_vmem [thread:$0]  %s46, 32, %s48, [#allocation6]
    $region13: #{tpu_custom_call.1} parent=1 // pred_fallthru
      _
    // Predicated region
    $region14: #{tpu_custom_call.1} parent=1 // pred_check
      _
    $region15: #{tpu_custom_call.1} parent=1 // pred_check_branch
      %52 = sbr.rel (0) target = $region17
    $region16: #{tpu_custom_call.1} parent=1 // pred_region
      %54 = vsyncadd [#allocation9], 0
      %s55 = sshll.u32 %s3, 4
      %s56 = int_to_ptr.hbm [resolvable:$true] %s55
      %s57 = sshll.u32 [#allocation8], 4
      %s58 = int_to_ptr.vmem [resolvable:$true] %s57
      %63 = dma.hbm_to_vmem [thread:$0]  %s56, 4096, %s58, [#allocation9], 128, 128, 8
    $region17: #{tpu_custom_call.1} parent=1 // pred_fallthru
      _
    // Predicated region
    $region18: #{tpu_custom_call.1} parent=1 // pred_check
      _
    $region19: #{tpu_custom_call.1} parent=1 // pred_check_branch
      %65 = sbr.rel (0) target = $region21
    $region20: #{tpu_custom_call.1} parent=1 // pred_region
      _
    $region21: #{tpu_custom_call.1} parent=1 // pred_fallthru
      _
    // Predicated region
    $region22: #{tpu_custom_call.1} parent=1 // pred_check
      _
    $region23: #{tpu_custom_call.1} parent=1 // pred_check_branch
      %67 = sbr.rel (0) target = $region25
    $region24: #{tpu_custom_call.1} parent=1 // pred_region
      %69 = vsyncadd [#allocation9], 0
      %s70 = sshll.u32 %s5, 4
      %s71 = int_to_ptr.hbm [resolvable:$true] %s70
      %s72 = sshll.u32 [#allocation10], 4
      %s73 = int_to_ptr.vmem [resolvable:$true] %s72
      %78 = dma.hbm_to_vmem [thread:$0]  %s71, 2048, %s73, [#allocation9], 64, 64, 4
    $region25: #{tpu_custom_call.1} parent=1 // pred_fallthru
      _
    // Predicated region
    $region26: #{tpu_custom_call.1} parent=1 // pred_check
      _
    $region27: #{tpu_custom_call.1} parent=1 // pred_check_branch
      %80 = sbr.rel (0) target = $region29
    $region28: #{tpu_custom_call.1} parent=1 // pred_region
      _
    $region29: #{tpu_custom_call.1} parent=1 // pred_fallthru
      _
    // Predicated region
    $region30: #{tpu_custom_call.1} parent=1 // pred_check
      _
    $region31: #{tpu_custom_call.1} parent=1 // pred_check_branch
      %82 = sbr.rel (0) target = $region33
    $region32: #{tpu_custom_call.1} parent=1 // pred_region
      %84 = dma.done [#allocation3], 128
    $region33: #{tpu_custom_call.1} parent=1 // pred_fallthru
      _
    // Predicated region
    $region34: #{tpu_custom_call.1} parent=1 // pred_check
      _
    $region35: #{tpu_custom_call.1} parent=1 // pred_check_branch
      %86 = sbr.rel (0) target = $region37
    $region36: #{tpu_custom_call.1} parent=1 // pred_region
      %88 = dma.done [#allocation6], 6272
    $region37: #{tpu_custom_call.1} parent=1 // pred_fallthru
      _
    // Predicated region
    $region38: #{tpu_custom_call.1} parent=1 // pred_check
      _
    $region39: #{tpu_custom_call.1} parent=1 // pred_check_branch
      %90 = sbr.rel (0) target = $region41
    $region40: #{tpu_custom_call.1} parent=1 // pred_region
      %92 = dma.done [#allocation6], 32
    $region41: #{tpu_custom_call.1} parent=1 // pred_fallthru
      _
    // Predicated region
    $region42: #{tpu_custom_call.1} parent=1 // pred_check
      _
    $region43: #{tpu_custom_call.1} parent=1 // pred_check_branch
      %94 = sbr.rel (0) target = $region45
    $region44: #{tpu_custom_call.1} parent=1 // pred_region
      %96 = dma.done [#allocation9], 4096
    $region45: #{tpu_custom_call.1} parent=1 // pred_fallthru
      _
    // Predicated region
    $region46: #{tpu_custom_call.1} parent=1 // pred_check
      _
    $region47: #{tpu_custom_call.1} parent=1 // pred_check_branch
      %98 = sbr.rel (0) target = $region49
    $region48: #{tpu_custom_call.1} parent=1 // pred_region
      %100 = dma.done [#allocation9], 2048
    $region49: #{tpu_custom_call.1} parent=1 // pred_fallthru
      _
    %v102 = vld [vmem:[#allocation2] sm:$0xff]
    %104 = vst [vmem:[#allocation1] ss:$4 sm:$0xff] %v102
    %v105 = vld.sshfl [vmem:[#allocation1] sm:$0xff pattern:$0x73625140]
    %v106 = vld.sshfl [vmem:[#allocation1 + $0x8] sm:$0xff pattern:$0x73625140]
    %v107 = vld.sshfl [vmem:[#allocation1 + $0x10] sm:$0xff pattern:$0x73625140]
    %v108 = vld.sshfl [vmem:[#allocation1 + $0x18] sm:$0xff pattern:$0x73625140]
    %v113 = vpack.c.bf16 %v105, %v105
    %v114 = vpack.c.bf16 %v106, %v106
    %v115 = vpack.c.bf16 %v107, %v107
    %v116 = vpack.c.bf16 %v108, %v108
    %v117 = vld [vmem:[#allocation5] sm:$0xff]
    %v118 = vld [vmem:[#allocation5 + $0x8] sm:$0xff]
    %v119 = vld [vmem:[#allocation5 + $0x10] sm:$0xff]
    %v120 = vld [vmem:[#allocation5 + $0x18] sm:$0xff]
    %v121 = vld [vmem:[#allocation5 + $0x20] sm:$0xff]
    %v122 = vld [vmem:[#allocation5 + $0x28] sm:$0xff]
    %v123 = vld [vmem:[#allocation5 + $0x30] sm:$0xff]
    %v124 = vld [vmem:[#allocation5 + $0x38] sm:$0xff]
    %v125 = vld [vmem:[#allocation5 + $0x40] sm:$0xff]
    %v126 = vld [vmem:[#allocation5 + $0x48] sm:$0xff]
    %v127 = vld [vmem:[#allocation5 + $0x50] sm:$0xff]
    %v128 = vld [vmem:[#allocation5 + $0x58] sm:$0xff]
    %v129 = vld [vmem:[#allocation5 + $0x60] sm:$0xff]
    %v130 = vld [vmem:[#allocation5 + $0x68] sm:$0xff]
    %v131 = vld [vmem:[#allocation5 + $0x70] sm:$0xff]
    %v132 = vld [vmem:[#allocation5 + $0x78] sm:$0xff]
    %v133 = vld [vmem:[#allocation5 + $0x80] sm:$0xff]
    %v134 = vld [vmem:[#allocation5 + $0x88] sm:$0xff]
    %v135 = vld [vmem:[#allocation5 + $0x90] sm:$0xff]
    %v136 = vld [vmem:[#allocation5 + $0x98] sm:$0xff]
    %v137 = vld [vmem:[#allocation5 + $0xa0] sm:$0xff]
    %v138 = vld [vmem:[#allocation5 + $0xa8] sm:$0xff]
    %v139 = vld [vmem:[#allocation5 + $0xb0] sm:$0xff]
    %v140 = vld [vmem:[#allocation5 + $0xb8] sm:$0xff]
    %v141 = vld [vmem:[#allocation5 + $0xc0] sm:$0xff]
    %v142 = vld [vmem:[#allocation5 + $0xc8] sm:$0xff]
    %v143 = vld [vmem:[#allocation5 + $0xd0] sm:$0xff]
    %v144 = vld [vmem:[#allocation5 + $0xd8] sm:$0xff]
    %v145 = vld [vmem:[#allocation5 + $0xe0] sm:$0xff]
    %v146 = vld [vmem:[#allocation5 + $0xe8] sm:$0xff]
    %v147 = vld [vmem:[#allocation5 + $0xf0] sm:$0xff]
    %v148 = vld [vmem:[#allocation5 + $0xf8] sm:$0xff]
    %v149 = vld [vmem:[#allocation5 + $0x100] sm:$0xff]
    %v150 = vld [vmem:[#allocation5 + $0x108] sm:$0xff]
    %v151 = vld [vmem:[#allocation5 + $0x110] sm:$0xff]
    %v152 = vld [vmem:[#allocation5 + $0x118] sm:$0xff]
    %v153 = vld [vmem:[#allocation5 + $0x120] sm:$0xff]
    %v154 = vld [vmem:[#allocation5 + $0x128] sm:$0xff]
    %v155 = vld [vmem:[#allocation5 + $0x130] sm:$0xff]
    %v156 = vld [vmem:[#allocation5 + $0x138] sm:$0xff]
    %v157 = vld [vmem:[#allocation5 + $0x140] sm:$0xff]
    %v158 = vld [vmem:[#allocation5 + $0x148] sm:$0xff]
    %v159 = vld [vmem:[#allocation5 + $0x150] sm:$0xff]
    %v160 = vld [vmem:[#allocation5 + $0x158] sm:$0xff]
    %v161 = vld [vmem:[#allocation5 + $0x160] sm:$0xff]
    %v162 = vld [vmem:[#allocation5 + $0x168] sm:$0xff]
    %v163 = vld [vmem:[#allocation5 + $0x170] sm:$0xff]
    %v164 = vld [vmem:[#allocation5 + $0x178] sm:$0xff]
    %v165 = vld [vmem:[#allocation5 + $0x180] sm:$0xff]
    %v166 = vld [vmem:[#allocation7] sm:$0x3]
    %v168 = vperm.slane %v166, 0
    %v169 = vperm.slane %v166, 1
    %v221 = vunpack.c.l.b16 %v117
    %v222 = vunpack.c.h.b16 %v117
    %v223 = vunpack.c.l.b16 %v118
    %v224 = vunpack.c.h.b16 %v118
    %v225 = vunpack.c.l.b16 %v119
    %v226 = vunpack.c.h.b16 %v119
    %v227 = vunpack.c.l.b16 %v120
    %v228 = vunpack.c.h.b16 %v120
    %v229 = vunpack.c.l.b16 %v121
    %v230 = vunpack.c.h.b16 %v121
    %v231 = vunpack.c.l.b16 %v122
    %v232 = vunpack.c.h.b16 %v122
    %v233 = vunpack.c.l.b16 %v123
    %v234 = vunpack.c.h.b16 %v123
    %v235 = vunpack.c.l.b16 %v124
    %v236 = vunpack.c.h.b16 %v124
    %v237 = vunpack.c.l.b16 %v125
    %v238 = vunpack.c.h.b16 %v125
    %v239 = vunpack.c.l.b16 %v126
    %v240 = vunpack.c.h.b16 %v126
    %v241 = vunpack.c.l.b16 %v127
    %v242 = vunpack.c.h.b16 %v127
    %v243 = vunpack.c.l.b16 %v128
    %v244 = vunpack.c.h.b16 %v128
    %v245 = vunpack.c.l.b16 %v129
    %v246 = vunpack.c.h.b16 %v129
    %v247 = vunpack.c.l.b16 %v130
    %v248 = vunpack.c.h.b16 %v130
    %v249 = vunpack.c.l.b16 %v131
    %v250 = vunpack.c.h.b16 %v131
    %v251 = vunpack.c.l.b16 %v132
    %v252 = vunpack.c.h.b16 %v132
    %v253 = vunpack.c.l.b16 %v133
    %v254 = vunpack.c.h.b16 %v133
    %v255 = vunpack.c.l.b16 %v134
    %v256 = vunpack.c.h.b16 %v134
    %v257 = vunpack.c.l.b16 %v135
    %v258 = vunpack.c.h.b16 %v135
    %v259 = vunpack.c.l.b16 %v136
    %v260 = vunpack.c.h.b16 %v136
    %v261 = vunpack.c.l.b16 %v137
    %v262 = vunpack.c.h.b16 %v137
    %v263 = vunpack.c.l.b16 %v138
    %v264 = vunpack.c.h.b16 %v138
    %v265 = vunpack.c.l.b16 %v139
    %v266 = vunpack.c.h.b16 %v139
    %v267 = vunpack.c.l.b16 %v140
    %v268 = vunpack.c.h.b16 %v140
    %v269 = vunpack.c.l.b16 %v141
    %v270 = vunpack.c.h.b16 %v141
    %v271 = vunpack.c.l.b16 %v142
    %v272 = vunpack.c.h.b16 %v142
    %v273 = vunpack.c.l.b16 %v143
    %v274 = vunpack.c.h.b16 %v143
    %v275 = vunpack.c.l.b16 %v144
    %v276 = vunpack.c.h.b16 %v144
    %v277 = vunpack.c.l.b16 %v145
    %v278 = vunpack.c.h.b16 %v145
    %v279 = vunpack.c.l.b16 %v146
    %v280 = vunpack.c.h.b16 %v146
    %v281 = vunpack.c.l.b16 %v147
    %v282 = vunpack.c.h.b16 %v147
    %v283 = vunpack.c.l.b16 %v148
    %v284 = vunpack.c.h.b16 %v148
    %v285 = vunpack.c.l.b16 %v149
    %v286 = vunpack.c.h.b16 %v149
    %v287 = vunpack.c.l.b16 %v150
    %v288 = vunpack.c.h.b16 %v150
    %v289 = vunpack.c.l.b16 %v151
    %v290 = vunpack.c.h.b16 %v151
    %v291 = vunpack.c.l.b16 %v152
    %v292 = vunpack.c.h.b16 %v152
    %v293 = vunpack.c.l.b16 %v153
    %v294 = vunpack.c.h.b16 %v153
    %v295 = vunpack.c.l.b16 %v154
    %v296 = vunpack.c.h.b16 %v154
    %v297 = vunpack.c.l.b16 %v155
    %v298 = vunpack.c.h.b16 %v155
    %v299 = vunpack.c.l.b16 %v156
    %v300 = vunpack.c.h.b16 %v156
    %v301 = vunpack.c.l.b16 %v157
    %v302 = vunpack.c.h.b16 %v157
    %v303 = vunpack.c.l.b16 %v158
    %v304 = vunpack.c.h.b16 %v158
    %v305 = vunpack.c.l.b16 %v159
    %v306 = vunpack.c.h.b16 %v159
    %v307 = vunpack.c.l.b16 %v160
    %v308 = vunpack.c.h.b16 %v160
    %v309 = vunpack.c.l.b16 %v161
    %v310 = vunpack.c.h.b16 %v161
    %v311 = vunpack.c.l.b16 %v162
    %v312 = vunpack.c.h.b16 %v162
    %v313 = vunpack.c.l.b16 %v163
    %v314 = vunpack.c.h.b16 %v163
    %v315 = vunpack.c.l.b16 %v164
    %v316 = vunpack.c.h.b16 %v164
    %v317 = vunpack.c.l.b16 %v165
    %v318 = vunpack.c.h.b16 %v165
    %v319 = vpack.c.b16 %v223, %v221
    %v320 = vpack.c.b16 %v224, %v222
    %v321 = vpack.c.b16 %v227, %v225
    %v322 = vpack.c.b16 %v228, %v226
    %v323 = vpack.c.b16 %v231, %v229
    %v324 = vpack.c.b16 %v232, %v230
    %v325 = vpack.c.b16 %v235, %v233
    %v326 = vpack.c.b16 %v236, %v234
    %v327 = vpack.c.b16 %v239, %v237
    %v328 = vpack.c.b16 %v240, %v238
    %v329 = vpack.c.b16 %v243, %v241
    %v330 = vpack.c.b16 %v244, %v242
    %v331 = vpack.c.b16 %v247, %v245
    %v332 = vpack.c.b16 %v248, %v246
    %v333 = vpack.c.b16 %v251, %v249
    %v334 = vpack.c.b16 %v252, %v250
    %v335 = vpack.c.b16 %v255, %v253
    %v336 = vpack.c.b16 %v256, %v254
    %v337 = vpack.c.b16 %v259, %v257
    %v338 = vpack.c.b16 %v260, %v258
    %v339 = vpack.c.b16 %v263, %v261
    %v340 = vpack.c.b16 %v264, %v262
    %v341 = vpack.c.b16 %v267, %v265
    %v342 = vpack.c.b16 %v268, %v266
    %v343 = vpack.c.b16 %v271, %v269
    %v344 = vpack.c.b16 %v272, %v270
    %v345 = vpack.c.b16 %v275, %v273
    %v346 = vpack.c.b16 %v276, %v274
    %v347 = vpack.c.b16 %v279, %v277
    %v348 = vpack.c.b16 %v280, %v278
    %v349 = vpack.c.b16 %v283, %v281
    %v350 = vpack.c.b16 %v284, %v282
    %v351 = vpack.c.b16 %v287, %v285
    %v352 = vpack.c.b16 %v288, %v286
    %v353 = vpack.c.b16 %v291, %v289
    %v354 = vpack.c.b16 %v292, %v290
    %v355 = vpack.c.b16 %v295, %v293
    %v356 = vpack.c.b16 %v296, %v294
    %v357 = vpack.c.b16 %v299, %v297
    %v358 = vpack.c.b16 %v300, %v298
    %v359 = vpack.c.b16 %v303, %v301
    %v360 = vpack.c.b16 %v304, %v302
    %v361 = vpack.c.b16 %v307, %v305
    %v362 = vpack.c.b16 %v308, %v306
    %v363 = vpack.c.b16 %v311, %v309
    %v364 = vpack.c.b16 %v312, %v310
    %v365 = vpack.c.b16 %v315, %v313
    %v366 = vpack.c.b16 %v316, %v314
    %v367 = vpack.c.b16 %v317, %v317
    %v368 = vpack.c.b16 %v318, %v318
    %vm417 = vcmask 64512
    %v419 = vsel %vm417, %v116, 0
    %vm421 = vcmask 1043456
    %v423 = vsel %vm421, %v367, 0
    %v426 = vsel %vm421, %v368, 0
    %428 = vmatpush.bf16.msra.mxu0 %v333
    %429 = vmatpush.bf16.msra.mxu0 %v331
    %430 = vmatpush.bf16.msra.mxu0 %v329
    %431 = vmatpush.bf16.msra.mxu0 %v327
    %432 = vmatpush.bf16.msra.mxu0 %v325
    %433 = vmatpush.bf16.msra.mxu0 %v323
    %434 = vmatpush.bf16.msra.mxu0 %v321
    %435 = vmatpush.bf16.msra.mxu0 %v319
    %436 = vmatmul.bf16.gmra.mxu0 %v113
    %v437 = vpop.f32.mrf.mxu0
    %v438 = vadd.f32 %v168, %v437
    %v439 = vpop.f32.mrf.mxu0
    %440 = vdwg.mxu0
    %441 = vmatpush.bf16.msra.mxu0 %v349
    %442 = vmatpush.bf16.msra.mxu0 %v347
    %443 = vmatpush.bf16.msra.mxu0 %v345
    %444 = vmatpush.bf16.msra.mxu0 %v343
    %445 = vmatpush.bf16.msra.mxu0 %v341
    %446 = vmatpush.bf16.msra.mxu0 %v339
    %447 = vmatpush.bf16.msra.mxu0 %v337
    %448 = vmatpush.bf16.msra.mxu0 %v335
    %449 = vmatmul.bf16.gmra.mxu0 %v114
    %v450 = vpop.f32.mrf.mxu0
    %v451 = vadd.f32 %v438, %v450
    %v452 = vpop.f32.mrf.mxu0
    %453 = vdwg.mxu0
    %454 = vmatpush.bf16.msra.mxu0 %v365
    %455 = vmatpush.bf16.msra.mxu0 %v363
    %456 = vmatpush.bf16.msra.mxu0 %v361
    %457 = vmatpush.bf16.msra.mxu0 %v359
    %458 = vmatpush.bf16.msra.mxu0 %v357
    %459 = vmatpush.bf16.msra.mxu0 %v355
    %460 = vmatpush.bf16.msra.mxu0 %v353
    %461 = vmatpush.bf16.msra.mxu0 %v351
    %462 = vmatmul.bf16.gmra.mxu0 %v115
    %v463 = vpop.f32.mrf.mxu0
    %v464 = vadd.f32 %v451, %v463
    %v465 = vpop.f32.mrf.mxu0
    %466 = vdwg.mxu0
    %467 = vmatpush.bf16.msra.mxu0 0
    %468 = vmatpush.bf16.msra.mxu0 0
    %469 = vmatpush.bf16.msra.mxu0 0
    %470 = vmatpush.bf16.msra.mxu0 0
    %471 = vmatpush.bf16.msra.mxu0 0
    %472 = vmatpush.bf16.msra.mxu0 0
    %473 = vmatpush.bf16.msra.mxu0 0
    %474 = vmatpush.bf16.msra.mxu0 %v423
    %475 = vmatmul.bf16.gmra.mxu0 %v419
    %v476 = vpop.f32.mrf.mxu0
    %v477 = vadd.f32 %v464, %v476
    %v478 = vpop.f32.mrf.mxu0
    %479 = vdwg.mxu0
    %480 = vmatpush.bf16.msra.mxu0 %v334
    %481 = vmatpush.bf16.msra.mxu0 %v332
    %482 = vmatpush.bf16.msra.mxu0 %v330
    %483 = vmatpush.bf16.msra.mxu0 %v328
    %484 = vmatpush.bf16.msra.mxu0 %v326
    %485 = vmatpush.bf16.msra.mxu0 %v324
    %486 = vmatpush.bf16.msra.mxu0 %v322
    %487 = vmatpush.bf16.msra.mxu0 %v320
    %488 = vmatmul.bf16.gmra.mxu0 %v113
    %v489 = vpop.f32.mrf.mxu0
    %v490 = vadd.f32 %v169, %v489
    %v491 = vpop.f32.mrf.mxu0
    %492 = vdwg.mxu0
    %493 = vmatpush.bf16.msra.mxu0 %v350
    %494 = vmatpush.bf16.msra.mxu0 %v348
    %495 = vmatpush.bf16.msra.mxu0 %v346
    %496 = vmatpush.bf16.msra.mxu0 %v344
    %497 = vmatpush.bf16.msra.mxu0 %v342
    %498 = vmatpush.bf16.msra.mxu0 %v340
    %499 = vmatpush.bf16.msra.mxu0 %v338
    %500 = vmatpush.bf16.msra.mxu0 %v336
    %501 = vmatmul.bf16.gmra.mxu0 %v114
    %v502 = vpop.f32.mrf.mxu0
    %v503 = vadd.f32 %v490, %v502
    %v504 = vpop.f32.mrf.mxu0
    %505 = vdwg.mxu0
    %506 = vmatpush.bf16.msra.mxu0 %v366
    %507 = vmatpush.bf16.msra.mxu0 %v364
    %508 = vmatpush.bf16.msra.mxu0 %v362
    %509 = vmatpush.bf16.msra.mxu0 %v360
    %510 = vmatpush.bf16.msra.mxu0 %v358
    %511 = vmatpush.bf16.msra.mxu0 %v356
    %512 = vmatpush.bf16.msra.mxu0 %v354
    %513 = vmatpush.bf16.msra.mxu0 %v352
    %514 = vmatmul.bf16.gmra.mxu0 %v115
    %v515 = vpop.f32.mrf.mxu0
    %v516 = vadd.f32 %v503, %v515
    %v517 = vpop.f32.mrf.mxu0
    %518 = vdwg.mxu0
    %519 = vmatpush.bf16.msra.mxu0 0
    %520 = vmatpush.bf16.msra.mxu0 0
    %521 = vmatpush.bf16.msra.mxu0 0
    %522 = vmatpush.bf16.msra.mxu0 0
    %523 = vmatpush.bf16.msra.mxu0 0
    %524 = vmatpush.bf16.msra.mxu0 0
    %525 = vmatpush.bf16.msra.mxu0 0
    %526 = vmatpush.bf16.msra.mxu0 %v426
    %527 = vmatmul.bf16.gmra.mxu0 %v419
    %v528 = vpop.f32.mrf.mxu0
    %v529 = vadd.f32 %v516, %v528
    %v530 = vpop.f32.mrf.mxu0
    %531 = vdwg.mxu0
    %v532 = vmax.f32 %v477, 0.0
    %v533 = vmax.f32 %v529, 0.0
    %v534 = vpack.c.bf16 %v532, %v532
    %v535 = vpack.c.bf16 %v533, %v533
    %v536 = vld [vmem:[#allocation8] sm:$0xff]
    %v537 = vld [vmem:[#allocation8 + $0x8] sm:$0xff]
    %v538 = vld [vmem:[#allocation8 + $0x10] sm:$0xff]
    %v539 = vld [vmem:[#allocation8 + $0x18] sm:$0xff]
    %v540 = vld [vmem:[#allocation8 + $0x20] sm:$0xff]
    %v541 = vld [vmem:[#allocation8 + $0x28] sm:$0xff]
    %v542 = vld [vmem:[#allocation8 + $0x30] sm:$0xff]
    %v543 = vld [vmem:[#allocation8 + $0x38] sm:$0xff]
    %v544 = vld [vmem:[#allocation8 + $0x40] sm:$0xff]
    %v545 = vld [vmem:[#allocation8 + $0x48] sm:$0xff]
    %v546 = vld [vmem:[#allocation8 + $0x50] sm:$0xff]
    %v547 = vld [vmem:[#allocation8 + $0x58] sm:$0xff]
    %v548 = vld [vmem:[#allocation8 + $0x60] sm:$0xff]
    %v549 = vld [vmem:[#allocation8 + $0x68] sm:$0xff]
    %v550 = vld [vmem:[#allocation8 + $0x70] sm:$0xff]
    %v551 = vld [vmem:[#allocation8 + $0x78] sm:$0xff]
    %v552 = vld [vmem:[#allocation8 + $0x80] sm:$0xff]
    %v553 = vld [vmem:[#allocation8 + $0x88] sm:$0xff]
    %v554 = vld [vmem:[#allocation8 + $0x90] sm:$0xff]
    %v555 = vld [vmem:[#allocation8 + $0x98] sm:$0xff]
    %v556 = vld [vmem:[#allocation8 + $0xa0] sm:$0xff]
    %v557 = vld [vmem:[#allocation8 + $0xa8] sm:$0xff]
    %v558 = vld [vmem:[#allocation8 + $0xb0] sm:$0xff]
    %v559 = vld [vmem:[#allocation8 + $0xb8] sm:$0xff]
    %v560 = vld [vmem:[#allocation8 + $0xc0] sm:$0xff]
    %v561 = vld [vmem:[#allocation8 + $0xc8] sm:$0xff]
    %v562 = vld [vmem:[#allocation8 + $0xd0] sm:$0xff]
    %v563 = vld [vmem:[#allocation8 + $0xd8] sm:$0xff]
    %v564 = vld [vmem:[#allocation8 + $0xe0] sm:$0xff]
    %v565 = vld [vmem:[#allocation8 + $0xe8] sm:$0xff]
    %v566 = vld [vmem:[#allocation8 + $0xf0] sm:$0xff]
    %v567 = vld [vmem:[#allocation8 + $0xf8] sm:$0xff]
    %v568 = vld [vmem:[%s4] sm:$0x3]
    %v570 = vperm.slane %v568, 0
    %v571 = vperm.slane %v568, 1
    %v606 = vunpack.c.l.b16 %v536
    %v607 = vunpack.c.h.b16 %v536
    %v608 = vunpack.c.l.b16 %v537
    %v609 = vunpack.c.h.b16 %v537
    %v610 = vunpack.c.l.b16 %v538
    %v611 = vunpack.c.h.b16 %v538
    %v612 = vunpack.c.l.b16 %v539
    %v613 = vunpack.c.h.b16 %v539
    %v614 = vunpack.c.l.b16 %v540
    %v615 = vunpack.c.h.b16 %v540
    %v616 = vunpack.c.l.b16 %v541
    %v617 = vunpack.c.h.b16 %v541
    %v618 = vunpack.c.l.b16 %v542
    %v619 = vunpack.c.h.b16 %v542
    %v620 = vunpack.c.l.b16 %v543
    %v621 = vunpack.c.h.b16 %v543
    %v622 = vunpack.c.l.b16 %v544
    %v623 = vunpack.c.h.b16 %v544
    %v624 = vunpack.c.l.b16 %v545
    %v625 = vunpack.c.h.b16 %v545
    %v626 = vunpack.c.l.b16 %v546
    %v627 = vunpack.c.h.b16 %v546
    %v628 = vunpack.c.l.b16 %v547
    %v629 = vunpack.c.h.b16 %v547
    %v630 = vunpack.c.l.b16 %v548
    %v631 = vunpack.c.h.b16 %v548
    %v632 = vunpack.c.l.b16 %v549
    %v633 = vunpack.c.h.b16 %v549
    %v634 = vunpack.c.l.b16 %v550
    %v635 = vunpack.c.h.b16 %v550
    %v636 = vunpack.c.l.b16 %v551
    %v637 = vunpack.c.h.b16 %v551
    %v638 = vunpack.c.l.b16 %v552
    %v639 = vunpack.c.h.b16 %v552
    %v640 = vunpack.c.l.b16 %v553
    %v641 = vunpack.c.h.b16 %v553
    %v642 = vunpack.c.l.b16 %v554
    %v643 = vunpack.c.h.b16 %v554
    %v644 = vunpack.c.l.b16 %v555
    %v645 = vunpack.c.h.b16 %v555
    %v646 = vunpack.c.l.b16 %v556
    %v647 = vunpack.c.h.b16 %v556
    %v648 = vunpack.c.l.b16 %v557
    %v649 = vunpack.c.h.b16 %v557
    %v650 = vunpack.c.l.b16 %v558
    %v651 = vunpack.c.h.b16 %v558
    %v652 = vunpack.c.l.b16 %v559
    %v653 = vunpack.c.h.b16 %v559
    %v654 = vunpack.c.l.b16 %v560
    %v655 = vunpack.c.h.b16 %v560
    %v656 = vunpack.c.l.b16 %v561
    %v657 = vunpack.c.h.b16 %v561
    %v658 = vunpack.c.l.b16 %v562
    %v659 = vunpack.c.h.b16 %v562
    %v660 = vunpack.c.l.b16 %v563
    %v661 = vunpack.c.h.b16 %v563
    %v662 = vunpack.c.l.b16 %v564
    %v663 = vunpack.c.h.b16 %v564
    %v664 = vunpack.c.l.b16 %v565
    %v665 = vunpack.c.h.b16 %v565
    %v666 = vunpack.c.l.b16 %v566
    %v667 = vunpack.c.h.b16 %v566
    %v668 = vunpack.c.l.b16 %v567
    %v669 = vunpack.c.h.b16 %v567
    %v670 = vpack.c.b16 %v608, %v606
    %v671 = vpack.c.b16 %v609, %v607
    %v672 = vpack.c.b16 %v612, %v610
    %v673 = vpack.c.b16 %v613, %v611
    %v674 = vpack.c.b16 %v616, %v614
    %v675 = vpack.c.b16 %v617, %v615
    %v676 = vpack.c.b16 %v620, %v618
    %v677 = vpack.c.b16 %v621, %v619
    %v678 = vpack.c.b16 %v624, %v622
    %v679 = vpack.c.b16 %v625, %v623
    %v680 = vpack.c.b16 %v628, %v626
    %v681 = vpack.c.b16 %v629, %v627
    %v682 = vpack.c.b16 %v632, %v630
    %v683 = vpack.c.b16 %v633, %v631
    %v684 = vpack.c.b16 %v636, %v634
    %v685 = vpack.c.b16 %v637, %v635
    %v686 = vpack.c.b16 %v640, %v638
    %v687 = vpack.c.b16 %v641, %v639
    %v688 = vpack.c.b16 %v644, %v642
    %v689 = vpack.c.b16 %v645, %v643
    %v690 = vpack.c.b16 %v648, %v646
    %v691 = vpack.c.b16 %v649, %v647
    %v692 = vpack.c.b16 %v652, %v650
    %v693 = vpack.c.b16 %v653, %v651
    %v694 = vpack.c.b16 %v656, %v654
    %v695 = vpack.c.b16 %v657, %v655
    %v696 = vpack.c.b16 %v660, %v658
    %v697 = vpack.c.b16 %v661, %v659
    %v698 = vpack.c.b16 %v664, %v662
    %v699 = vpack.c.b16 %v665, %v663
    %v700 = vpack.c.b16 %v668, %v666
    %v701 = vpack.c.b16 %v669, %v667
    %734 = vmatpush.bf16.msra.mxu0 %v684
    %735 = vmatpush.bf16.msra.mxu0 %v682
    %736 = vmatpush.bf16.msra.mxu0 %v680
    %737 = vmatpush.bf16.msra.mxu0 %v678
    %738 = vmatpush.bf16.msra.mxu0 %v676
    %739 = vmatpush.bf16.msra.mxu0 %v674
    %740 = vmatpush.bf16.msra.mxu0 %v672
    %741 = vmatpush.bf16.msra.mxu0 %v670
    %742 = vmatmul.bf16.gmra.mxu0 %v534
    %v743 = vpop.f32.mrf.mxu0
    %v744 = vadd.f32 %v570, %v743
    %v745 = vpop.f32.mrf.mxu0
    %746 = vdwg.mxu0
    %747 = vmatpush.bf16.msra.mxu0 %v700
    %748 = vmatpush.bf16.msra.mxu0 %v698
    %749 = vmatpush.bf16.msra.mxu0 %v696
    %750 = vmatpush.bf16.msra.mxu0 %v694
    %751 = vmatpush.bf16.msra.mxu0 %v692
    %752 = vmatpush.bf16.msra.mxu0 %v690
    %753 = vmatpush.bf16.msra.mxu0 %v688
    %754 = vmatpush.bf16.msra.mxu0 %v686
    %755 = vmatmul.bf16.gmra.mxu0 %v535
    %v756 = vpop.f32.mrf.mxu0
    %v757 = vadd.f32 %v744, %v756
    %v758 = vpop.f32.mrf.mxu0
    %759 = vdwg.mxu0
    %760 = vmatpush.bf16.msra.mxu0 %v685
    %761 = vmatpush.bf16.msra.mxu0 %v683
    %762 = vmatpush.bf16.msra.mxu0 %v681
    %763 = vmatpush.bf16.msra.mxu0 %v679
    %764 = vmatpush.bf16.msra.mxu0 %v677
    %765 = vmatpush.bf16.msra.mxu0 %v675
    %766 = vmatpush.bf16.msra.mxu0 %v673
    %767 = vmatpush.bf16.msra.mxu0 %v671
    %768 = vmatmul.bf16.gmra.mxu0 %v534
    %v769 = vpop.f32.mrf.mxu0
    %v770 = vadd.f32 %v571, %v769
    %v771 = vpop.f32.mrf.mxu0
    %772 = vdwg.mxu0
    %773 = vmatpush.bf16.msra.mxu0 %v701
    %774 = vmatpush.bf16.msra.mxu0 %v699
    %775 = vmatpush.bf16.msra.mxu0 %v697
    %776 = vmatpush.bf16.msra.mxu0 %v695
    %777 = vmatpush.bf16.msra.mxu0 %v693
    %778 = vmatpush.bf16.msra.mxu0 %v691
    %779 = vmatpush.bf16.msra.mxu0 %v689
    %780 = vmatpush.bf16.msra.mxu0 %v687
    %781 = vmatmul.bf16.gmra.mxu0 %v535
    %v782 = vpop.f32.mrf.mxu0
    %v783 = vadd.f32 %v770, %v782
    %v784 = vpop.f32.mrf.mxu0
    %785 = vdwg.mxu0
    %v786 = vmax.f32 %v757, 0.0
    %v787 = vmax.f32 %v783, 0.0
    %v788 = vpack.c.bf16 %v786, %v786
    %v789 = vpack.c.bf16 %v787, %v787
    %v790 = vld [vmem:[#allocation10] sm:$0xf]
    %v791 = vld [vmem:[#allocation10 + $0x4] sm:$0xf]
    %v792 = vld [vmem:[#allocation10 + $0x8] sm:$0xf]
    %v793 = vld [vmem:[#allocation10 + $0xc] sm:$0xf]
    %v794 = vld [vmem:[#allocation10 + $0x10] sm:$0xf]
    %v795 = vld [vmem:[#allocation10 + $0x14] sm:$0xf]
    %v796 = vld [vmem:[#allocation10 + $0x18] sm:$0xf]
    %v797 = vld [vmem:[#allocation10 + $0x1c] sm:$0xf]
    %v798 = vld [vmem:[#allocation10 + $0x20] sm:$0xf]
    %v799 = vld [vmem:[#allocation10 + $0x24] sm:$0xf]
    %v800 = vld [vmem:[#allocation10 + $0x28] sm:$0xf]
    %v801 = vld [vmem:[#allocation10 + $0x2c] sm:$0xf]
    %v802 = vld [vmem:[#allocation10 + $0x30] sm:$0xf]
    %v803 = vld [vmem:[#allocation10 + $0x34] sm:$0xf]
    %v804 = vld [vmem:[#allocation10 + $0x38] sm:$0xf]
    %v805 = vld [vmem:[#allocation10 + $0x3c] sm:$0xf]
    %v806 = vld [vmem:[#allocation10 + $0x40] sm:$0xf]
    %v807 = vld [vmem:[#allocation10 + $0x44] sm:$0xf]
    %v808 = vld [vmem:[#allocation10 + $0x48] sm:$0xf]
    %v809 = vld [vmem:[#allocation10 + $0x4c] sm:$0xf]
    %v810 = vld [vmem:[#allocation10 + $0x50] sm:$0xf]
    %v811 = vld [vmem:[#allocation10 + $0x54] sm:$0xf]
    %v812 = vld [vmem:[#allocation10 + $0x58] sm:$0xf]
    %v813 = vld [vmem:[#allocation10 + $0x5c] sm:$0xf]
    %v814 = vld [vmem:[#allocation10 + $0x60] sm:$0xf]
    %v815 = vld [vmem:[#allocation10 + $0x64] sm:$0xf]
    %v816 = vld [vmem:[#allocation10 + $0x68] sm:$0xf]
    %v817 = vld [vmem:[#allocation10 + $0x6c] sm:$0xf]
    %v818 = vld [vmem:[#allocation10 + $0x70] sm:$0xf]
    %v819 = vld [vmem:[#allocation10 + $0x74] sm:$0xf]
    %v820 = vld [vmem:[#allocation10 + $0x78] sm:$0xf]
    %v821 = vld [vmem:[#allocation10 + $0x7c] sm:$0xf]
    %v822 = vld [vmem:[%s6] sm:$0x1]
    %v824 = vperm.slane %v822, 0
    %v858 = vunpack.c.l.b16 %v790
    %v859 = vunpack.c.l.b16 %v791
    %v860 = vunpack.c.l.b16 %v792
    %v861 = vunpack.c.l.b16 %v793
    %v862 = vunpack.c.l.b16 %v794
    %v863 = vunpack.c.l.b16 %v795
    %v864 = vunpack.c.l.b16 %v796
    %v865 = vunpack.c.l.b16 %v797
    %v866 = vunpack.c.l.b16 %v798
    %v867 = vunpack.c.l.b16 %v799
    %v868 = vunpack.c.l.b16 %v800
    %v869 = vunpack.c.l.b16 %v801
    %v870 = vunpack.c.l.b16 %v802
    %v871 = vunpack.c.l.b16 %v803
    %v872 = vunpack.c.l.b16 %v804
    %v873 = vunpack.c.l.b16 %v805
    %v874 = vunpack.c.l.b16 %v806
    %v875 = vunpack.c.l.b16 %v807
    %v876 = vunpack.c.l.b16 %v808
    %v877 = vunpack.c.l.b16 %v809
    %v878 = vunpack.c.l.b16 %v810
    %v879 = vunpack.c.l.b16 %v811
    %v880 = vunpack.c.l.b16 %v812
    %v881 = vunpack.c.l.b16 %v813
    %v882 = vunpack.c.l.b16 %v814
    %v883 = vunpack.c.l.b16 %v815
    %v884 = vunpack.c.l.b16 %v816
    %v885 = vunpack.c.l.b16 %v817
    %v886 = vunpack.c.l.b16 %v818
    %v887 = vunpack.c.l.b16 %v819
    %v888 = vunpack.c.l.b16 %v820
    %v889 = vunpack.c.l.b16 %v821
    %v890 = vpack.c.b16 %v859, %v858
    %v891 = vpack.c.b16 %v861, %v860
    %v892 = vpack.c.b16 %v863, %v862
    %v893 = vpack.c.b16 %v865, %v864
    %v894 = vpack.c.b16 %v867, %v866
    %v895 = vpack.c.b16 %v869, %v868
    %v896 = vpack.c.b16 %v871, %v870
    %v897 = vpack.c.b16 %v873, %v872
    %v898 = vpack.c.b16 %v875, %v874
    %v899 = vpack.c.b16 %v877, %v876
    %v900 = vpack.c.b16 %v879, %v878
    %v901 = vpack.c.b16 %v881, %v880
    %v902 = vpack.c.b16 %v883, %v882
    %v903 = vpack.c.b16 %v885, %v884
    %v904 = vpack.c.b16 %v887, %v886
    %v905 = vpack.c.b16 %v889, %v888
    %922 = vmatpush.bf16.msra.mxu0 %v897
    %923 = vmatpush.bf16.msra.mxu0 %v896
    %924 = vmatpush.bf16.msra.mxu0 %v895
    %925 = vmatpush.bf16.msra.mxu0 %v894
    %926 = vmatpush.bf16.msra.mxu0 %v893
    %927 = vmatpush.bf16.msra.mxu0 %v892
    %928 = vmatpush.bf16.msra.mxu0 %v891
    %929 = vmatpush.bf16.msra.mxu0 %v890
    %930 = vmatmul.bf16.gmra.mxu0 %v788
    %v931 = vpop.f32.mrf.mxu0
    %v932 = vadd.f32 %v824, %v931
    %v933 = vpop.f32.mrf.mxu0
    %934 = vdwg.mxu0
    %935 = vmatpush.bf16.msra.mxu0 %v905
    %936 = vmatpush.bf16.msra.mxu0 %v904
    %937 = vmatpush.bf16.msra.mxu0 %v903
    %938 = vmatpush.bf16.msra.mxu0 %v902
    %939 = vmatpush.bf16.msra.mxu0 %v901
    %940 = vmatpush.bf16.msra.mxu0 %v900
    %941 = vmatpush.bf16.msra.mxu0 %v899
    %942 = vmatpush.bf16.msra.mxu0 %v898
    %943 = vmatmul.bf16.gmra.mxu0 %v789
    %v944 = vpop.f32.mrf.mxu0
    %v945 = vadd.f32 %v932, %v944
    %v946 = vpop.f32.mrf.mxu0
    %947 = vdwg.mxu0
    %948 = vst [vmem:[#allocation11] sm:$0x3] %v945
    // Predicated region
    $region50: #{tpu_custom_call.1} parent=1 // pred_check
      _
    $region51: #{tpu_custom_call.1} parent=1 // pred_check_branch
      %950 = sbr.rel (0) target = $region53
    $region52: #{tpu_custom_call.1} parent=1 // pred_region
      %952 = vsyncadd [#allocation4], 0
      %s954 = sshll.u32 [#allocation11], 4
      %s955 = int_to_ptr.vmem [resolvable:$true] %s954
      %s956 = sshll.u32 %s7, 4
      %s957 = int_to_ptr.hbm [resolvable:$true] %s956
      %959 = dma.vmem_to_hbm [thread:$0]  %s955, 32, %s957, [#allocation4]
    $region53: #{tpu_custom_call.1} parent=1 // pred_fallthru
      _
    // Predicated region
    $region54: #{tpu_custom_call.1} parent=1 // pred_check
      _
    $region55: #{tpu_custom_call.1} parent=1 // pred_check_branch
      %961 = sbr.rel (0) target = $region57
    $region56: #{tpu_custom_call.1} parent=1 // pred_region
      %963 = dma.done [#allocation4], 32
    $region57: #{tpu_custom_call.1} parent=1 // pred_fallthru
      _
    %964 = vsyncpa [#allocation3], 1
    %965 = vsyncpa [#allocation6], 1
    %966 = vsyncpa [#allocation9], 1
    %967 = vsyncpa [#allocation4], 1

</llo_original>
